<compile_context>
chip_gen: v7x
topology: tpu7x:2x2x1
jax: 0.10.0
libtpu: 0.0.40
codegen_flags: <defaults>
</compile_context>

<pallas_src>
import jax
import jax.numpy as jnp
from jax.experimental import pallas as pl
from jax.experimental.pallas import tpu as pltpu

NEG_SLOPE = 0.01   # LeakyReLU slope used by LinearLayer
HIDDEN = 64        # hidden width of Dis_MLP


def _lrelu(v):
    # max(v, a*v) == leaky_relu(v, a) for 0 < a < 1; 2 VALU ops instead of 3.
    return jnp.maximum(v, NEG_SLOPE * v)


def _default_act_dtype():
    """bf16-resident activations on v6e/v7x; f32 on v5e (no bf16 VPU path)."""
    try:
        kind = jax.devices()[0].device_kind.lower()
    except Exception:
        return jnp.bfloat16
    if "v5e" in kind or "v5 lite" in kind or "v5litepod" in kind:
        return jnp.float32
    return jnp.bfloat16


def _make_kernel(act_dtype):
    def kernel(x_ref, w0_ref, b0_ref, wr_ref, br_ref,
               wg1_ref, bg1_ref, wg2_ref, bg2_ref, out_ref, zx_ref):
        # Feature-major dataflow: activations are (features, TILE_N); the row
        # tile sits on lanes -> wide MXU output dim, lane-dense stores.
        x = x_ref[...]                                            # (in_ch, T) bf16

        # MLP_B[0]: LinearLayer(in_ch, 64) + LeakyReLU
        z = _lrelu(jnp.dot(w0_ref[...], x,
                           preferred_element_type=jnp.float32)
                   + b0_ref[...]).astype(act_dtype)

        # MLP_B[1..4]: Res_MLP(64): z = z + LeakyReLU(Linear(z))  (static unroll)
        for i in range(4):
            h = _lrelu(jnp.dot(wr_ref[i], z.astype(jnp.bfloat16),
                               preferred_element_type=jnp.float32) + br_ref[i])
            z = z + h.astype(act_dtype)                           # residual add

        # LinearGeo[0]: LinearLayer(64 + in_ch, 64) on concat([z, x], -1).
        # Stage the concat feature-major in a VMEM bf16 buffer and do a single
        # K=(64+in_ch) matmul with the unsplit Wg1.
        zx_ref[:HIDDEN, :] = z.astype(jnp.bfloat16)
        zx_ref[HIDDEN:, :] = x
        h = _lrelu(jnp.dot(wg1_ref[...], zx_ref[...],
                           preferred_element_type=jnp.float32) + bg1_ref[...])

        # LinearGeo[1]: plain nn.Linear(64, out_ch)
        out_ref[...] = (jnp.dot(wg2_ref[...], h.astype(jnp.bfloat16),
                                preferred_element_type=jnp.float32)
                        + bg2_ref[...])
    return kernel


def dis_mlp_forward(x, params, *, tile_n=8192, act_dtype=None):
    """x: (N, in_ch) f32 -> (N, out_ch) f32."""
    (w0, b0, wr, br, wg1, bg1, wg2, bg2) = params
    n, in_ch = x.shape
    out_ch = wg2.shape[0]
    if act_dtype is None:
        act_dtype = _default_act_dtype()

    # Row tile: multiple of 128 (lane width), capped at the padded problem size,
    # and forced to produce >=2 grid steps when N allows (v7x megacore needs
    # >=2 steps on the "parallel" axis to use both TensorCores).
    n_lane = ((max(n, 1) + 127) // 128) * 128
    tile_n = max(128, min(((int(tile_n) + 127) // 128) * 128, n_lane))
    if n_lane >= 256 and pl.cdiv(n, tile_n) < 2:
        tile_n = ((n_lane // 2 + 127) // 128) * 128
    grid = (pl.cdiv(n, tile_n),)

    # Feature-major bf16 input: one fused transpose+cast pass, NO zero-fill /
    # scatter pad — Pallas partial blocks handle the ragged row tail (padded
    # columns are computed on garbage and their output writes are discarded).
    xt = x.T.astype(jnp.bfloat16)                                 # (in_ch, N)

    const2 = lambda i: (0, 0)
    const3 = lambda i: (0, 0, 0)
    resident = lambda a, im: pl.BlockSpec(a.shape, im)   # VMEM-resident weights

    out = pl.pallas_call(
        _make_kernel(act_dtype),
        out_shape=jax.ShapeDtypeStruct((out_ch, n), jnp.float32),
        grid=grid,
        in_specs=[
            pl.BlockSpec((in_ch, tile_n), lambda i: (0, i)),      # x row-tile
            resident(w0, const2), resident(b0, const2),
            resident(wr, const3), resident(br, const3),
            resident(wg1, const2), resident(bg1, const2),
            resident(wg2, const2), resident(bg2, const2),
        ],
        out_specs=pl.BlockSpec((out_ch, tile_n), lambda i: (0, i)),
        scratch_shapes=[pltpu.VMEM((HIDDEN + in_ch, tile_n), jnp.bfloat16)],
        compiler_params=pltpu.CompilerParams(
            dimension_semantics=("parallel",),     # megacore sharding on v7x
            vmem_limit_bytes=48 * 1024 * 1024),    # headroom for big row tiles
    )(xt, w0, b0, wr, br, wg1, bg1, wg2, bg2)

    return out.T                                                   # (N, out_ch)


def init_params(key, in_ch, out_ch, hidden=HIDDEN):
    """PyTorch-Linear-like uniform init, stored feature-major (out, in).

    Weights are bf16 (MXU input dtype); biases stay f32 (accumulator dtype).
    y = W @ a + b with W of shape (out, in) — PyTorch's native layout."""
    # TODO(synk): weights have no f32 master copy — fine for inference only.
    ks = jax.random.split(key, 16)

    def lin(kw, kb, fan_in, fan_out):
        bound = 1.0 / jnp.sqrt(fan_in)
        w = jax.random.uniform(kw, (fan_out, fan_in), jnp.float32, -bound, bound)
        b = jax.random.uniform(kb, (fan_out, 1), jnp.float32, -bound, bound)
        return w.astype(jnp.bfloat16), b

    # MLP_B first layer
    w0, b0 = lin(ks[0], ks[1], in_ch, hidden)

    # 4 residual blocks, stacked
    wr_list, br_list = [], []
    for i in range(4):
        w, b = lin(ks[2 + 2 * i], ks[3 + 2 * i], hidden, hidden)
        wr_list.append(w)
        br_list.append(b)
    wr = jnp.stack(wr_list, axis=0)          # (4, 64, 64) bf16
    br = jnp.stack(br_list, axis=0)          # (4, 64, 1)  f32

    # LinearGeo[0]: in = 64 + in_ch (kept UNSPLIT: single concat matmul)
    wg1, bg1 = lin(ks[10], ks[11], hidden + in_ch, hidden)

    # LinearGeo[1]: Linear(64, out_ch), no activation
    wg2, bg2 = lin(ks[12], ks[13], hidden, out_ch)

    return (w0, b0, wr, br, wg1, bg1, wg2, bg2)


def dis_mlp_reference(x, params, *, match_kernel_dtypes=True,
                      act_dtype=jnp.bfloat16):
    """Pure-JAX reference mirroring the PyTorch forward.

    match_kernel_dtypes=True mirrors the kernel's dtype policy (bf16 matmul
    inputs, f32 accumulation, act_dtype-resident activations) for a tight
    comparison; False keeps everything f32 (loose sanity check)."""
    (w0, b0, wr, br, wg1, bg1, wg2, bg2) = params
    mm = jnp.bfloat16 if match_kernel_dtypes else jnp.float32
    act = act_dtype if match_kernel_dtypes else jnp.float32
    cast = lambda a: a.astype(mm)

    def lin(w, b, a):
        return (jnp.dot(cast(w), cast(a), preferred_element_type=jnp.float32)
                + b.astype(jnp.float32))

    xt = x.T.astype(mm)                                 # feature-major (in_ch, N)
    z = _lrelu(lin(w0, b0, xt)).astype(act)
    for i in range(4):
        h = _lrelu(lin(wr[i], br[i], z))
        z = z + h.astype(act)
    zx = jnp.concatenate([z.astype(mm), cast(xt)], axis=0)
    h = _lrelu(jnp.dot(cast(wg1), zx, preferred_element_type=jnp.float32)
               + bg1.astype(jnp.float32))
    vp = lin(wg2, bg2, h)
    return vp.T                                         # (N, out_ch)


if __name__ == "__main__":
    key = jax.random.PRNGKey(0)
    k_x, k_p = jax.random.split(key)

    N, IN_CH, OUT_CH = 8, 16, 3
    x = jax.random.normal(k_x, (N, IN_CH), dtype=jnp.float32)
    params = init_params(k_p, IN_CH, OUT_CH)

    act_dtype = _default_act_dtype()
    out = jax.block_until_ready(dis_mlp_forward(x, params, act_dtype=act_dtype))
    assert out.shape == (N, OUT_CH)

    # Tight check against a reference with the same dtype policy as the kernel.
    ref_tight = dis_mlp_reference(x, params, match_kernel_dtypes=True,
                                  act_dtype=act_dtype)
    assert jnp.allclose(out, ref_tight, atol=1e-3, rtol=1e-3), \
        "mismatch vs kernel-dtype reference"

    # Loose sanity check against a pure-f32 reference of the PyTorch forward.
    ref_f32 = dis_mlp_reference(x, params, match_kernel_dtypes=False)
    assert jnp.allclose(out, ref_f32, atol=5e-2, rtol=5e-2), \
        "mismatch vs f32 reference"

    print("KERNEL_OK")
</pallas_src>

<mosaic_0001>
module attributes {stable_mosaic.version = 11 : i64} {
  func.func @kernel(%arg0: i32, %arg1: memref<16x128xbf16, #tpu.memory_space<vmem>>, %arg2: memref<64x16xbf16, #tpu.memory_space<vmem>>, %arg3: memref<64x1xf32, #tpu.memory_space<vmem>>, %arg4: memref<4x64x64xbf16, #tpu.memory_space<vmem>>, %arg5: memref<4x64x1xf32, #tpu.memory_space<vmem>>, %arg6: memref<64x80xbf16, #tpu.memory_space<vmem>>, %arg7: memref<64x1xf32, #tpu.memory_space<vmem>>, %arg8: memref<3x64xbf16, #tpu.memory_space<vmem>>, %arg9: memref<3x1xf32, #tpu.memory_space<vmem>>, %arg10: memref<3x128xf32, #tpu.memory_space<vmem>>, %arg11: memref<80x128xbf16, #tpu.memory_space<vmem>>) attributes {dimension_semantics = [#tpu.dimension_semantics<parallel>], iteration_bounds = array<i64: 1>, scalar_prefetch = 0 : i64, scratch_operands = 1 : i64, tpu.core_type = #tpu.core_type<tc>, window_params = [{transform_indices = @transform_0, window_bounds = array<i64: 16, 128>}, {pipeline_mode = #tpu.pipeline_mode<synchronous>, transform_indices = @transform_1, window_bounds = array<i64: 64, 16>}, {pipeline_mode = #tpu.pipeline_mode<synchronous>, transform_indices = @transform_2, window_bounds = array<i64: 64, 1>}, {pipeline_mode = #tpu.pipeline_mode<synchronous>, transform_indices = @transform_3, window_bounds = array<i64: 4, 64, 64>}, {pipeline_mode = #tpu.pipeline_mode<synchronous>, transform_indices = @transform_4, window_bounds = array<i64: 4, 64, 1>}, {pipeline_mode = #tpu.pipeline_mode<synchronous>, transform_indices = @transform_5, window_bounds = array<i64: 64, 80>}, {pipeline_mode = #tpu.pipeline_mode<synchronous>, transform_indices = @transform_6, window_bounds = array<i64: 64, 1>}, {pipeline_mode = #tpu.pipeline_mode<synchronous>, transform_indices = @transform_7, window_bounds = array<i64: 3, 64>}, {pipeline_mode = #tpu.pipeline_mode<synchronous>, transform_indices = @transform_8, window_bounds = array<i64: 3, 1>}, {transform_indices = @transform_9, window_bounds = array<i64: 3, 128>}]} {
    %c0 = arith.constant 0 : index
    %c0_0 = arith.constant 0 : index
    %0 = vector.load %arg1[%c0, %c0_0] : memref<16x128xbf16, #tpu.memory_space<vmem>>, vector<16x128xbf16>
    %c0_1 = arith.constant 0 : index
    %c0_2 = arith.constant 0 : index
    %1 = vector.load %arg2[%c0_1, %c0_2] : memref<64x16xbf16, #tpu.memory_space<vmem>>, vector<64x16xbf16>
    %cst = arith.constant dense<0.000000e+00> : vector<64x128xf32>
    %2 = tpu.matmul %1, %0, %cst {dimension_numbers = #tpu.dot_dimension_numbers<[1], [0], [0], [1], [0, 0, 1, 1], [], []>} : vector<64x16xbf16>, vector<16x128xbf16>, vector<64x128xf32> -> vector<64x128xf32>
    %c0_3 = arith.constant 0 : index
    %c0_4 = arith.constant 0 : index
    %3 = vector.load %arg3[%c0_3, %c0_4] : memref<64x1xf32, #tpu.memory_space<vmem>>, vector<64x1xf32>
    %4 = vector.broadcast %3 : vector<64x1xf32> to vector<64x128xf32>
    %5 = arith.addf %2, %4 : vector<64x128xf32>
    %cst_5 = arith.constant 0.00999999977 : f32
    %6 = vector.broadcast %cst_5 : f32 to vector<64x128xf32>
    %7 = arith.mulf %6, %5 : vector<64x128xf32>
    %8 = arith.maximumf %5, %7 : vector<64x128xf32>
    %9 = arith.truncf %8 : vector<64x128xf32> to vector<64x128xbf16>
    %c0_6 = arith.constant 0 : index
    %c0_7 = arith.constant 0 : index
    %c0_8 = arith.constant 0 : index
    %10 = vector.load %arg4[%c0_6, %c0_7, %c0_8] : memref<4x64x64xbf16, #tpu.memory_space<vmem>>, vector<1x64x64xbf16>
    %11 = vector.shape_cast %10 : vector<1x64x64xbf16> to vector<64x64xbf16>
    %cst_9 = arith.constant dense<0.000000e+00> : vector<64x128xf32>
    %12 = tpu.matmul %11, %9, %cst_9 {dimension_numbers = #tpu.dot_dimension_numbers<[1], [0], [0], [1], [0, 0, 1, 1], [], []>} : vector<64x64xbf16>, vector<64x128xbf16>, vector<64x128xf32> -> vector<64x128xf32>
    %c0_10 = arith.constant 0 : index
    %c0_11 = arith.constant 0 : index
    %c0_12 = arith.constant 0 : index
    %13 = vector.load %arg5[%c0_10, %c0_11, %c0_12] : memref<4x64x1xf32, #tpu.memory_space<vmem>>, vector<1x64x1xf32>
    %14 = vector.shape_cast %13 : vector<1x64x1xf32> to vector<64x1xf32>
    %15 = vector.broadcast %14 : vector<64x1xf32> to vector<64x128xf32>
    %16 = arith.addf %12, %15 : vector<64x128xf32>
    %cst_13 = arith.constant 0.00999999977 : f32
    %17 = vector.broadcast %cst_13 : f32 to vector<64x128xf32>
    %18 = arith.mulf %17, %16 : vector<64x128xf32>
    %19 = arith.maximumf %16, %18 : vector<64x128xf32>
    %20 = arith.truncf %19 : vector<64x128xf32> to vector<64x128xbf16>
    %21 = arith.addf %9, %20 : vector<64x128xbf16>
    %c1 = arith.constant 1 : index
    %c0_14 = arith.constant 0 : index
    %c0_15 = arith.constant 0 : index
    %22 = vector.load %arg4[%c1, %c0_14, %c0_15] : memref<4x64x64xbf16, #tpu.memory_space<vmem>>, vector<1x64x64xbf16>
    %23 = vector.shape_cast %22 : vector<1x64x64xbf16> to vector<64x64xbf16>
    %cst_16 = arith.constant dense<0.000000e+00> : vector<64x128xf32>
    %24 = tpu.matmul %23, %21, %cst_16 {dimension_numbers = #tpu.dot_dimension_numbers<[1], [0], [0], [1], [0, 0, 1, 1], [], []>} : vector<64x64xbf16>, vector<64x128xbf16>, vector<64x128xf32> -> vector<64x128xf32>
    %c1_17 = arith.constant 1 : index
    %c0_18 = arith.constant 0 : index
    %c0_19 = arith.constant 0 : index
    %25 = vector.load %arg5[%c1_17, %c0_18, %c0_19] : memref<4x64x1xf32, #tpu.memory_space<vmem>>, vector<1x64x1xf32>
    %26 = vector.shape_cast %25 : vector<1x64x1xf32> to vector<64x1xf32>
    %27 = vector.broadcast %26 : vector<64x1xf32> to vector<64x128xf32>
    %28 = arith.addf %24, %27 : vector<64x128xf32>
    %cst_20 = arith.constant 0.00999999977 : f32
    %29 = vector.broadcast %cst_20 : f32 to vector<64x128xf32>
    %30 = arith.mulf %29, %28 : vector<64x128xf32>
    %31 = arith.maximumf %28, %30 : vector<64x128xf32>
    %32 = arith.truncf %31 : vector<64x128xf32> to vector<64x128xbf16>
    %33 = arith.addf %21, %32 : vector<64x128xbf16>
    %c2 = arith.constant 2 : index
    %c0_21 = arith.constant 0 : index
    %c0_22 = arith.constant 0 : index
    %34 = vector.load %arg4[%c2, %c0_21, %c0_22] : memref<4x64x64xbf16, #tpu.memory_space<vmem>>, vector<1x64x64xbf16>
    %35 = vector.shape_cast %34 : vector<1x64x64xbf16> to vector<64x64xbf16>
    %cst_23 = arith.constant dense<0.000000e+00> : vector<64x128xf32>
    %36 = tpu.matmul %35, %33, %cst_23 {dimension_numbers = #tpu.dot_dimension_numbers<[1], [0], [0], [1], [0, 0, 1, 1], [], []>} : vector<64x64xbf16>, vector<64x128xbf16>, vector<64x128xf32> -> vector<64x128xf32>
    %c2_24 = arith.constant 2 : index
    %c0_25 = arith.constant 0 : index
    %c0_26 = arith.constant 0 : index
    %37 = vector.load %arg5[%c2_24, %c0_25, %c0_26] : memref<4x64x1xf32, #tpu.memory_space<vmem>>, vector<1x64x1xf32>
    %38 = vector.shape_cast %37 : vector<1x64x1xf32> to vector<64x1xf32>
    %39 = vector.broadcast %38 : vector<64x1xf32> to vector<64x128xf32>
    %40 = arith.addf %36, %39 : vector<64x128xf32>
    %cst_27 = arith.constant 0.00999999977 : f32
    %41 = vector.broadcast %cst_27 : f32 to vector<64x128xf32>
    %42 = arith.mulf %41, %40 : vector<64x128xf32>
    %43 = arith.maximumf %40, %42 : vector<64x128xf32>
    %44 = arith.truncf %43 : vector<64x128xf32> to vector<64x128xbf16>
    %45 = arith.addf %33, %44 : vector<64x128xbf16>
    %c3 = arith.constant 3 : index
    %c0_28 = arith.constant 0 : index
    %c0_29 = arith.constant 0 : index
    %46 = vector.load %arg4[%c3, %c0_28, %c0_29] : memref<4x64x64xbf16, #tpu.memory_space<vmem>>, vector<1x64x64xbf16>
    %47 = vector.shape_cast %46 : vector<1x64x64xbf16> to vector<64x64xbf16>
    %cst_30 = arith.constant dense<0.000000e+00> : vector<64x128xf32>
    %48 = tpu.matmul %47, %45, %cst_30 {dimension_numbers = #tpu.dot_dimension_numbers<[1], [0], [0], [1], [0, 0, 1, 1], [], []>} : vector<64x64xbf16>, vector<64x128xbf16>, vector<64x128xf32> -> vector<64x128xf32>
    %c3_31 = arith.constant 3 : index
    %c0_32 = arith.constant 0 : index
    %c0_33 = arith.constant 0 : index
    %49 = vector.load %arg5[%c3_31, %c0_32, %c0_33] : memref<4x64x1xf32, #tpu.memory_space<vmem>>, vector<1x64x1xf32>
    %50 = vector.shape_cast %49 : vector<1x64x1xf32> to vector<64x1xf32>
    %51 = vector.broadcast %50 : vector<64x1xf32> to vector<64x128xf32>
    %52 = arith.addf %48, %51 : vector<64x128xf32>
    %cst_34 = arith.constant 0.00999999977 : f32
    %53 = vector.broadcast %cst_34 : f32 to vector<64x128xf32>
    %54 = arith.mulf %53, %52 : vector<64x128xf32>
    %55 = arith.maximumf %52, %54 : vector<64x128xf32>
    %56 = arith.truncf %55 : vector<64x128xf32> to vector<64x128xbf16>
    %57 = arith.addf %45, %56 : vector<64x128xbf16>
    %c0_35 = arith.constant 0 : index
    %c0_36 = arith.constant 0 : index
    %58 = vector.load %arg11[%c0_35, %c0_36] : memref<80x128xbf16, #tpu.memory_space<vmem>>, vector<64x128xbf16>
    tpu.vector_store %arg11[%c0_35, %c0_36], %57 {strides = array<i32>} : memref<80x128xbf16, #tpu.memory_space<vmem>>, vector<64x128xbf16>,
    %c64 = arith.constant 64 : index
    %c0_37 = arith.constant 0 : index
    %59 = vector.load %arg11[%c64, %c0_37] : memref<80x128xbf16, #tpu.memory_space<vmem>>, vector<16x128xbf16>
    tpu.vector_store %arg11[%c64, %c0_37], %0 {strides = array<i32>} : memref<80x128xbf16, #tpu.memory_space<vmem>>, vector<16x128xbf16>,
    %c0_38 = arith.constant 0 : index
    %c0_39 = arith.constant 0 : index
    %60 = vector.load %arg6[%c0_38, %c0_39] : memref<64x80xbf16, #tpu.memory_space<vmem>>, vector<64x80xbf16>
    %c0_40 = arith.constant 0 : index
    %c0_41 = arith.constant 0 : index
    %61 = vector.load %arg11[%c0_40, %c0_41] : memref<80x128xbf16, #tpu.memory_space<vmem>>, vector<80x128xbf16>
    %cst_42 = arith.constant dense<0.000000e+00> : vector<64x128xf32>
    %62 = tpu.matmul %60, %61, %cst_42 {dimension_numbers = #tpu.dot_dimension_numbers<[1], [0], [0], [1], [0, 0, 1, 1], [], []>} : vector<64x80xbf16>, vector<80x128xbf16>, vector<64x128xf32> -> vector<64x128xf32>
    %c0_43 = arith.constant 0 : index
    %c0_44 = arith.constant 0 : index
    %63 = vector.load %arg7[%c0_43, %c0_44] : memref<64x1xf32, #tpu.memory_space<vmem>>, vector<64x1xf32>
    %64 = vector.broadcast %63 : vector<64x1xf32> to vector<64x128xf32>
    %65 = arith.addf %62, %64 : vector<64x128xf32>
    %cst_45 = arith.constant 0.00999999977 : f32
    %66 = vector.broadcast %cst_45 : f32 to vector<64x128xf32>
    %67 = arith.mulf %66, %65 : vector<64x128xf32>
    %68 = arith.maximumf %65, %67 : vector<64x128xf32>
    %c0_46 = arith.constant 0 : index
    %c0_47 = arith.constant 0 : index
    %69 = vector.load %arg8[%c0_46, %c0_47] : memref<3x64xbf16, #tpu.memory_space<vmem>>, vector<3x64xbf16>
    %70 = arith.truncf %68 : vector<64x128xf32> to vector<64x128xbf16>
    %cst_48 = arith.constant dense<0.000000e+00> : vector<3x128xf32>
    %71 = tpu.matmul %69, %70, %cst_48 {dimension_numbers = #tpu.dot_dimension_numbers<[1], [0], [0], [1], [0, 0, 1, 1], [], []>} : vector<3x64xbf16>, vector<64x128xbf16>, vector<3x128xf32> -> vector<3x128xf32>
    %c0_49 = arith.constant 0 : index
    %c0_50 = arith.constant 0 : index
    %72 = vector.load %arg9[%c0_49, %c0_50] : memref<3x1xf32, #tpu.memory_space<vmem>>, vector<3x1xf32>
    %73 = vector.broadcast %72 : vector<3x1xf32> to vector<3x128xf32>
    %74 = arith.addf %71, %73 : vector<3x128xf32>
    %c0_51 = arith.constant 0 : index
    %c0_52 = arith.constant 0 : index
    %75 = vector.load %arg10[%c0_51, %c0_52] : memref<3x128xf32, #tpu.memory_space<vmem>>, vector<3x128xf32>
    tpu.vector_store %arg10[%c0_51, %c0_52], %74 {strides = array<i32>} : memref<3x128xf32, #tpu.memory_space<vmem>>, vector<3x128xf32>,
    return
  }
  func.func @transform_0(%arg0: i32) -> (i32, i32) {
    %c0_i32 = arith.constant 0 : i32
    %c0_i32_0 = arith.constant 0 : i32
    return %c0_i32, %arg0 : i32, i32
  }
  func.func @transform_1(%arg0: i32) -> (i32, i32) {
    %c0_i32 = arith.constant 0 : i32
    %c0_i32_0 = arith.constant 0 : i32
    %c0_i32_1 = arith.constant 0 : i32
    return %c0_i32, %c0_i32_0 : i32, i32
  }
  func.func @transform_2(%arg0: i32) -> (i32, i32) {
    %c0_i32 = arith.constant 0 : i32
    %c0_i32_0 = arith.constant 0 : i32
    %c0_i32_1 = arith.constant 0 : i32
    return %c0_i32, %c0_i32_0 : i32, i32
  }
  func.func @transform_3(%arg0: i32) -> (i32, i32, i32) {
    %c0_i32 = arith.constant 0 : i32
    %c0_i32_0 = arith.constant 0 : i32
    %c0_i32_1 = arith.constant 0 : i32
    %c0_i32_2 = arith.constant 0 : i32
    return %c0_i32, %c0_i32_0, %c0_i32_1 : i32, i32, i32
  }
  func.func @transform_4(%arg0: i32) -> (i32, i32, i32) {
    %c0_i32 = arith.constant 0 : i32
    %c0_i32_0 = arith.constant 0 : i32
    %c0_i32_1 = arith.constant 0 : i32
    %c0_i32_2 = arith.constant 0 : i32
    return %c0_i32, %c0_i32_0, %c0_i32_1 : i32, i32, i32
  }
  func.func @transform_5(%arg0: i32) -> (i32, i32) {
    %c0_i32 = arith.constant 0 : i32
    %c0_i32_0 = arith.constant 0 : i32
    %c0_i32_1 = arith.constant 0 : i32
    return %c0_i32, %c0_i32_0 : i32, i32
  }
  func.func @transform_6(%arg0: i32) -> (i32, i32) {
    %c0_i32 = arith.constant 0 : i32
    %c0_i32_0 = arith.constant 0 : i32
    %c0_i32_1 = arith.constant 0 : i32
    return %c0_i32, %c0_i32_0 : i32, i32
  }
  func.func @transform_7(%arg0: i32) -> (i32, i32) {
    %c0_i32 = arith.constant 0 : i32
    %c0_i32_0 = arith.constant 0 : i32
    %c0_i32_1 = arith.constant 0 : i32
    return %c0_i32, %c0_i32_0 : i32, i32
  }
  func.func @transform_8(%arg0: i32) -> (i32, i32) {
    %c0_i32 = arith.constant 0 : i32
    %c0_i32_0 = arith.constant 0 : i32
    %c0_i32_1 = arith.constant 0 : i32
    return %c0_i32, %c0_i32_0 : i32, i32
  }
  func.func @transform_9(%arg0: i32) -> (i32, i32) {
    %c0_i32 = arith.constant 0 : i32
    %c0_i32_0 = arith.constant 0 : i32
    return %c0_i32, %arg0 : i32, i32
  }
}

</mosaic_0001>

<llo_original>
// kernel: tpu_custom_call.1
$region0: #{tpu_custom_call.1}
  #allocation0 [shape = 'u32[]', space=smem, size = 0x4, offset = 0x4, fixed_abs, tag = 'smem constant byte address 0x4 - core index']
  #allocation1 [shape = 'u32[144,128]{1,0:T(1,128)}', space=vmem, size = 0x12000, scoped, tag = 'internal scratch']
  #allocation2 [shape = 'bf16[80,128]{1,0:T(16,128)(2,1)}', space=vmem, size = 0x5000, scoped, tag = 'scratch operand']
  %s0 = inlined_call_operand.vmem [shape: bf16[16,8], index: 0, kind: input, shape index: {}]
  %s1 = inlined_call_operand.vmem [shape: bf16[64,16], index: 1, kind: input, shape index: {}]
  %s2 = inlined_call_operand.vmem [shape: f32[64,1], index: 2, kind: input, shape index: {}]
  %s3 = inlined_call_operand.vmem [shape: bf16[4,64,64], index: 3, kind: input, shape index: {}]
  %s4 = inlined_call_operand.vmem [shape: f32[4,64,1], index: 4, kind: input, shape index: {}]
  %s5 = inlined_call_operand.vmem [shape: bf16[64,80], index: 5, kind: input, shape index: {}]
  %s6 = inlined_call_operand.vmem [shape: f32[64,1], index: 6, kind: input, shape index: {}]
  %s7 = inlined_call_operand.vmem [shape: bf16[3,64], index: 7, kind: input, shape index: {}]
  %s8 = inlined_call_operand.vmem [shape: f32[3,1], index: 8, kind: input, shape index: {}]
  %s9 = inlined_call_operand.hbm [shape: f32[3,8], index: 9, kind: output, shape index: {}]
  %s10 = sld [smem:[#allocation0]]
  $region46: #{tpu_custom_call.1} parent=0
    _
  %s12 = ssub.s32 1, %s10
  %s13 = scalar_select 0, %s12, %s10
  $region1: #{tpu_custom_call.1} parent=0
    #allocation3 [shape = 'u8[2048]{0}', space=vmem, size = 0x800, scoped, tag = 'output window, operand 0, single buffered']
    #allocation4 [shape = 's32[1]{0}', space=sflag, size = 0x4, scoped, tag = 'scoped memory for tpu_custom_call.1']
    %14 = vsyncpa [#allocation4], 0
    // Predicated region
    $region2: #{tpu_custom_call.1} parent=1 // pred_check
      _
    $region3: #{tpu_custom_call.1} parent=1 // pred_check_branch
      %16 = sbr.rel (0) target = $region5
    $region4: #{tpu_custom_call.1} parent=1 // pred_region
      _
    $region5: #{tpu_custom_call.1} parent=1 // pred_fallthru
      _
    // Predicated region
    $region6: #{tpu_custom_call.1} parent=1 // pred_check
      _
    $region7: #{tpu_custom_call.1} parent=1 // pred_check_branch
      %18 = sbr.rel (0) target = $region9
    $region8: #{tpu_custom_call.1} parent=1 // pred_region
      _
    $region9: #{tpu_custom_call.1} parent=1 // pred_fallthru
      _
    // Predicated region
    $region10: #{tpu_custom_call.1} parent=1 // pred_check
      _
    $region11: #{tpu_custom_call.1} parent=1 // pred_check_branch
      %20 = sbr.rel (0) target = $region13
    $region12: #{tpu_custom_call.1} parent=1 // pred_region
      _
    $region13: #{tpu_custom_call.1} parent=1 // pred_fallthru
      _
    // Predicated region
    $region14: #{tpu_custom_call.1} parent=1 // pred_check
      _
    $region15: #{tpu_custom_call.1} parent=1 // pred_check_branch
      %22 = sbr.rel (0) target = $region17
    $region16: #{tpu_custom_call.1} parent=1 // pred_region
      _
    $region17: #{tpu_custom_call.1} parent=1 // pred_fallthru
      _
    // Predicated region
    $region18: #{tpu_custom_call.1} parent=1 // pred_check
      _
    $region19: #{tpu_custom_call.1} parent=1 // pred_check_branch
      %24 = sbr.rel (0) target = $region21
    $region20: #{tpu_custom_call.1} parent=1 // pred_region
      _
    $region21: #{tpu_custom_call.1} parent=1 // pred_fallthru
      _
    // Predicated region
    $region22: #{tpu_custom_call.1} parent=1 // pred_check
      _
    $region23: #{tpu_custom_call.1} parent=1 // pred_check_branch
      %26 = sbr.rel (0) target = $region25
    $region24: #{tpu_custom_call.1} parent=1 // pred_region
      _
    $region25: #{tpu_custom_call.1} parent=1 // pred_fallthru
      _
    // Predicated region
    $region26: #{tpu_custom_call.1} parent=1 // pred_check
      _
    $region27: #{tpu_custom_call.1} parent=1 // pred_check_branch
      %28 = sbr.rel (0) target = $region29
    $region28: #{tpu_custom_call.1} parent=1 // pred_region
      _
    $region29: #{tpu_custom_call.1} parent=1 // pred_fallthru
      _
    // Predicated region
    $region30: #{tpu_custom_call.1} parent=1 // pred_check
      _
    $region31: #{tpu_custom_call.1} parent=1 // pred_check_branch
      %30 = sbr.rel (0) target = $region33
    $region32: #{tpu_custom_call.1} parent=1 // pred_region
      _
    $region33: #{tpu_custom_call.1} parent=1 // pred_fallthru
      _
    // Predicated region
    $region34: #{tpu_custom_call.1} parent=1 // pred_check
      _
    $region35: #{tpu_custom_call.1} parent=1 // pred_check_branch
      %32 = sbr.rel (0) target = $region37
    $region36: #{tpu_custom_call.1} parent=1 // pred_region
      _
    $region37: #{tpu_custom_call.1} parent=1 // pred_fallthru
      _
    %v34 = vld [vmem:[%s0] sm:$0xf]
    %v35 = vld [vmem:[%s0 + $0x4] sm:$0xf]
    %v36 = vld [vmem:[%s1] sm:$0xf]
    %v37 = vld [vmem:[%s1 + $0x4] sm:$0xf]
    %v38 = vld [vmem:[%s1 + $0x8] sm:$0xf]
    %v39 = vld [vmem:[%s1 + $0xc] sm:$0xf]
    %v40 = vld [vmem:[%s1 + $0x10] sm:$0xf]
    %v41 = vld [vmem:[%s1 + $0x14] sm:$0xf]
    %v42 = vld [vmem:[%s1 + $0x18] sm:$0xf]
    %v43 = vld [vmem:[%s1 + $0x1c] sm:$0xf]
    %v44 = vld [vmem:[%s2] sm:$0xff]
    %v45 = vld [vmem:[%s2 + $0x8] sm:$0xff]
    %v46 = vld [vmem:[%s2 + $0x10] sm:$0xff]
    %v47 = vld [vmem:[%s2 + $0x18] sm:$0xff]
    %v48 = vld [vmem:[%s2 + $0x20] sm:$0xff]
    %v49 = vld [vmem:[%s2 + $0x28] sm:$0xff]
    %v50 = vld [vmem:[%s2 + $0x30] sm:$0xff]
    %v51 = vld [vmem:[%s2 + $0x38] sm:$0xff]
    %53 = vset.pattern.permute.xlu0 0
    %54 = vperm.xlu0 %53, %v44
    %v55 = vpop.permute.xlu0 %54
    %58 = vset.pattern.permute.xlu0 0
    %59 = vperm.xlu0 %58, %v45
    %v60 = vpop.permute.xlu0 %59
    %63 = vset.pattern.permute.xlu0 0
    %64 = vperm.xlu0 %63, %v46
    %v65 = vpop.permute.xlu0 %64
    %68 = vset.pattern.permute.xlu0 0
    %69 = vperm.xlu0 %68, %v47
    %v70 = vpop.permute.xlu0 %69
    %73 = vset.pattern.permute.xlu0 0
    %74 = vperm.xlu0 %73, %v48
    %v75 = vpop.permute.xlu0 %74
    %78 = vset.pattern.permute.xlu0 0
    %79 = vperm.xlu0 %78, %v49
    %v80 = vpop.permute.xlu0 %79
    %83 = vset.pattern.permute.xlu0 0
    %84 = vperm.xlu0 %83, %v50
    %v85 = vpop.permute.xlu0 %84
    %88 = vset.pattern.permute.xlu0 0
    %89 = vperm.xlu0 %88, %v51
    %v90 = vpop.permute.xlu0 %89
    %v100 = vunpack.c.l.b16 %v36
    %v101 = vunpack.c.l.b16 %v37
    %v102 = vunpack.c.l.b16 %v38
    %v103 = vunpack.c.l.b16 %v39
    %v104 = vunpack.c.l.b16 %v40
    %v105 = vunpack.c.l.b16 %v41
    %v106 = vunpack.c.l.b16 %v42
    %v107 = vunpack.c.l.b16 %v43
    %v108 = vpack.c.b16 %v101, %v100
    %v109 = vpack.c.b16 %v103, %v102
    %v110 = vpack.c.b16 %v105, %v104
    %v111 = vpack.c.b16 %v107, %v106
    %v114 = vunpack.c.l.b16 %v34
    %v115 = vunpack.c.l.b16 %v35
    %v116 = vpack.c.b16 %v115, %v114
    %vm118 = vcmask 130048
    %v120 = vsel %vm118, %v108, 0
    %v123 = vsel %vm118, %v109, 0
    %v126 = vsel %vm118, %v110, 0
    %v129 = vsel %vm118, %v111, 0
    %131 = vmatprep.subr.bf16.mxu0 0
    %132 = vmatpush1.bf16.msra.mxu0 %v116
    %133 = vmatprep.subr.bf16.mxu0 0
    %134 = vmatpush1.bf16.msra.mxu0 0
    %135 = vmatprep.subr.bf16.mxu0 0
    %136 = vmatpush1.bf16.msra.mxu0 0
    %137 = vmatprep.subr.bf16.mxu0 0
    %138 = vmatpush1.bf16.msra.mxu0 0
    %139 = vmatprep.subr.bf16.mxu0 0
    %140 = vmatpush1.bf16.msra.mxu0 0
    %141 = vmatprep.subr.bf16.mxu0 0
    %142 = vmatpush1.bf16.msra.mxu0 0
    %143 = vmatprep.subr.bf16.mxu0 0
    %144 = vmatpush1.bf16.msra.mxu0 0
    %145 = vmatprep.subr.bf16.mxu0 0
    %146 = vmatpush1.bf16.msra.mxu0 0
    %147 = vmatprep.subr.bf16.mxu0 0
    %148 = vmatpush1.bf16.msra.mxu0 0
    %149 = vmatprep.subr.bf16.mxu0 0
    %150 = vmatpush1.bf16.msra.mxu0 0
    %151 = vmatprep.subr.bf16.mxu0 0
    %152 = vmatpush1.bf16.msra.mxu0 0
    %153 = vmatprep.subr.bf16.mxu0 0
    %154 = vmatpush1.bf16.msra.mxu0 0
    %155 = vmatprep.subr.bf16.mxu0 0
    %156 = vmatpush1.bf16.msra.mxu0 0
    %157 = vmatprep.subr.bf16.mxu0 0
    %158 = vmatpush1.bf16.msra.mxu0 0
    %159 = vmatprep.subr.bf16.mxu0 0
    %160 = vmatpush1.bf16.msra.mxu0 0
    %161 = vmatprep.subr.bf16.mxu0 0
    %162 = vmatpush1.bf16.msra.mxu0 0
    %163 = vmatprep.mubr.bf16.mxu0 0
    %164 = vmatmul.mubr.bf16.gmra.mrb[0].mxu0 %v120
    %v165 = vpop.f32.mrb[0].mxu0
    %v166 = vadd.f32 %v55, %v165
    %v167 = vpop.f32.mrb[0].mxu0
    %v168 = vpop.f32.mrb[0].mxu0
    %v169 = vadd.f32 %v60, %v168
    %v170 = vpop.f32.mrb[0].mxu0
    %171 = vmatprep.mubr.bf16.mxu0 0
    %172 = vmatmul.mubr.bf16.gmra.mrb[0].mxu0 %v123
    %v173 = vpop.f32.mrb[0].mxu0
    %v174 = vadd.f32 %v65, %v173
    %v175 = vpop.f32.mrb[0].mxu0
    %v176 = vpop.f32.mrb[0].mxu0
    %v177 = vadd.f32 %v70, %v176
    %v178 = vpop.f32.mrb[0].mxu0
    %179 = vmatprep.mubr.bf16.mxu0 0
    %180 = vmatmul.mubr.bf16.gmra.mrb[0].mxu0 %v126
    %v181 = vpop.f32.mrb[0].mxu0
    %v182 = vadd.f32 %v75, %v181
    %v183 = vpop.f32.mrb[0].mxu0
    %v184 = vpop.f32.mrb[0].mxu0
    %v185 = vadd.f32 %v80, %v184
    %v186 = vpop.f32.mrb[0].mxu0
    %187 = vmatprep.mubr.bf16.mxu0 0
    %188 = vmatmul.mubr.bf16.gmra.mrb[0].mxu0 %v129
    %v189 = vpop.f32.mrb[0].mxu0
    %v190 = vadd.f32 %v85, %v189
    %v191 = vpop.f32.mrb[0].mxu0
    %v192 = vpop.f32.mrb[0].mxu0
    %v193 = vadd.f32 %v90, %v192
    %v194 = vpop.f32.mrb[0].mxu0
    %195 = vdwg.mxu0
    %v196 = vmul.f32 %v166, 0.01
    %v197 = vmul.f32 %v169, 0.01
    %v198 = vmul.f32 %v174, 0.01
    %v199 = vmul.f32 %v177, 0.01
    %v200 = vmul.f32 %v182, 0.01
    %v201 = vmul.f32 %v185, 0.01
    %v202 = vmul.f32 %v190, 0.01
    %v203 = vmul.f32 %v193, 0.01
    %v204 = vmax.f32 %v166, %v196
    %v205 = vmax.f32 %v169, %v197
    %v206 = vmax.f32 %v174, %v198
    %v207 = vmax.f32 %v177, %v199
    %v208 = vmax.f32 %v182, %v200
    %v209 = vmax.f32 %v185, %v201
    %v210 = vmax.f32 %v190, %v202
    %v211 = vmax.f32 %v193, %v203
    %v212 = vpack.c.bf16 %v205, %v204
    %v213 = vpack.c.bf16 %v207, %v206
    %v214 = vpack.c.bf16 %v209, %v208
    %v215 = vpack.c.bf16 %v211, %v210
    %v216 = vld [vmem:[%s3] sm:$0xf]
    %v217 = vld [vmem:[%s3 + $0x4] sm:$0xf]
    %v218 = vld [vmem:[%s3 + $0x8] sm:$0xf]
    %v219 = vld [vmem:[%s3 + $0xc] sm:$0xf]
    %v220 = vld [vmem:[%s3 + $0x10] sm:$0xf]
    %v221 = vld [vmem:[%s3 + $0x14] sm:$0xf]
    %v222 = vld [vmem:[%s3 + $0x18] sm:$0xf]
    %v223 = vld [vmem:[%s3 + $0x1c] sm:$0xf]
    %v224 = vld [vmem:[%s4] sm:$0xff]
    %v225 = vld [vmem:[%s4 + $0x8] sm:$0xff]
    %v226 = vld [vmem:[%s4 + $0x10] sm:$0xff]
    %v227 = vld [vmem:[%s4 + $0x18] sm:$0xff]
    %v228 = vld [vmem:[%s4 + $0x20] sm:$0xff]
    %v229 = vld [vmem:[%s4 + $0x28] sm:$0xff]
    %v230 = vld [vmem:[%s4 + $0x30] sm:$0xff]
    %v231 = vld [vmem:[%s4 + $0x38] sm:$0xff]
    %233 = vset.pattern.permute.xlu0 0
    %234 = vperm.xlu0 %233, %v224
    %v235 = vpop.permute.xlu0 %234
    %238 = vset.pattern.permute.xlu0 0
    %239 = vperm.xlu0 %238, %v225
    %v240 = vpop.permute.xlu0 %239
    %243 = vset.pattern.permute.xlu0 0
    %244 = vperm.xlu0 %243, %v226
    %v245 = vpop.permute.xlu0 %244
    %248 = vset.pattern.permute.xlu0 0
    %249 = vperm.xlu0 %248, %v227
    %v250 = vpop.permute.xlu0 %249
    %253 = vset.pattern.permute.xlu0 0
    %254 = vperm.xlu0 %253, %v228
    %v255 = vpop.permute.xlu0 %254
    %258 = vset.pattern.permute.xlu0 0
    %259 = vperm.xlu0 %258, %v229
    %v260 = vpop.permute.xlu0 %259
    %263 = vset.pattern.permute.xlu0 0
    %264 = vperm.xlu0 %263, %v230
    %v265 = vpop.permute.xlu0 %264
    %268 = vset.pattern.permute.xlu0 0
    %269 = vperm.xlu0 %268, %v231
    %v270 = vpop.permute.xlu0 %269
    %v280 = vunpack.c.l.b16 %v216
    %v281 = vunpack.c.l.b16 %v217
    %v282 = vunpack.c.l.b16 %v218
    %v283 = vunpack.c.l.b16 %v219
    %v284 = vunpack.c.l.b16 %v220
    %v285 = vunpack.c.l.b16 %v221
    %v286 = vunpack.c.l.b16 %v222
    %v287 = vunpack.c.l.b16 %v223
    %v288 = vpack.c.b16 %v281, %v280
    %v289 = vpack.c.b16 %v283, %v282
    %v290 = vpack.c.b16 %v285, %v284
    %v291 = vpack.c.b16 %v287, %v286
    %vm292 = vcmask 523264
    %v294 = vsel %vm292, %v288, 0
    %v297 = vsel %vm292, %v289, 0
    %v300 = vsel %vm292, %v290, 0
    %v303 = vsel %vm292, %v291, 0
    %305 = vmatprep.subr.bf16.mxu0 0
    %306 = vmatpush1.bf16.msra.mxu0 %v212
    %307 = vmatprep.subr.bf16.mxu0 0
    %308 = vmatpush1.bf16.msra.mxu0 %v213
    %309 = vmatprep.subr.bf16.mxu0 0
    %310 = vmatpush1.bf16.msra.mxu0 %v214
    %311 = vmatprep.subr.bf16.mxu0 0
    %312 = vmatpush1.bf16.msra.mxu0 %v215
    %313 = vmatprep.subr.bf16.mxu0 0
    %314 = vmatpush1.bf16.msra.mxu0 0
    %315 = vmatprep.subr.bf16.mxu0 0
    %316 = vmatpush1.bf16.msra.mxu0 0
    %317 = vmatprep.subr.bf16.mxu0 0
    %318 = vmatpush1.bf16.msra.mxu0 0
    %319 = vmatprep.subr.bf16.mxu0 0
    %320 = vmatpush1.bf16.msra.mxu0 0
    %321 = vmatprep.subr.bf16.mxu0 0
    %322 = vmatpush1.bf16.msra.mxu0 0
    %323 = vmatprep.subr.bf16.mxu0 0
    %324 = vmatpush1.bf16.msra.mxu0 0
    %325 = vmatprep.subr.bf16.mxu0 0
    %326 = vmatpush1.bf16.msra.mxu0 0
    %327 = vmatprep.subr.bf16.mxu0 0
    %328 = vmatpush1.bf16.msra.mxu0 0
    %329 = vmatprep.subr.bf16.mxu0 0
    %330 = vmatpush1.bf16.msra.mxu0 0
    %331 = vmatprep.subr.bf16.mxu0 0
    %332 = vmatpush1.bf16.msra.mxu0 0
    %333 = vmatprep.subr.bf16.mxu0 0
    %334 = vmatpush1.bf16.msra.mxu0 0
    %335 = vmatprep.subr.bf16.mxu0 0
    %336 = vmatpush1.bf16.msra.mxu0 0
    %337 = vmatprep.mubr.bf16.mxu0 0
    %338 = vmatmul.mubr.bf16.gmra.mrb[0].mxu0 %v294
    %v339 = vpop.f32.mrb[0].mxu0
    %v340 = vadd.f32 %v235, %v339
    %v341 = vpop.f32.mrb[0].mxu0
    %v342 = vpop.f32.mrb[0].mxu0
    %v343 = vadd.f32 %v240, %v342
    %v344 = vpop.f32.mrb[0].mxu0
    %345 = vmatprep.mubr.bf16.mxu0 0
    %346 = vmatmul.mubr.bf16.gmra.mrb[0].mxu0 %v297
    %v347 = vpop.f32.mrb[0].mxu0
    %v348 = vadd.f32 %v245, %v347
    %v349 = vpop.f32.mrb[0].mxu0
    %v350 = vpop.f32.mrb[0].mxu0
    %v351 = vadd.f32 %v250, %v350
    %v352 = vpop.f32.mrb[0].mxu0
    %353 = vmatprep.mubr.bf16.mxu0 0
    %354 = vmatmul.mubr.bf16.gmra.mrb[0].mxu0 %v300
    %v355 = vpop.f32.mrb[0].mxu0
    %v356 = vadd.f32 %v255, %v355
    %v357 = vpop.f32.mrb[0].mxu0
    %v358 = vpop.f32.mrb[0].mxu0
    %v359 = vadd.f32 %v260, %v358
    %v360 = vpop.f32.mrb[0].mxu0
    %361 = vmatprep.mubr.bf16.mxu0 0
    %362 = vmatmul.mubr.bf16.gmra.mrb[0].mxu0 %v303
    %v363 = vpop.f32.mrb[0].mxu0
    %v364 = vadd.f32 %v265, %v363
    %v365 = vpop.f32.mrb[0].mxu0
    %v366 = vpop.f32.mrb[0].mxu0
    %v367 = vadd.f32 %v270, %v366
    %v368 = vpop.f32.mrb[0].mxu0
    %369 = vdwg.mxu0
    %v370 = vmul.f32 %v340, 0.01
    %v371 = vmul.f32 %v343, 0.01
    %v372 = vmul.f32 %v348, 0.01
    %v373 = vmul.f32 %v351, 0.01
    %v374 = vmul.f32 %v356, 0.01
    %v375 = vmul.f32 %v359, 0.01
    %v376 = vmul.f32 %v364, 0.01
    %v377 = vmul.f32 %v367, 0.01
    %v378 = vmax.f32 %v340, %v370
    %v379 = vmax.f32 %v343, %v371
    %v380 = vmax.f32 %v348, %v372
    %v381 = vmax.f32 %v351, %v373
    %v382 = vmax.f32 %v356, %v374
    %v383 = vmax.f32 %v359, %v375
    %v384 = vmax.f32 %v364, %v376
    %v385 = vmax.f32 %v367, %v377
    %v386 = vpack.c.bf16 %v379, %v378
    %v387 = vpack.c.bf16 %v381, %v380
    %v388 = vpack.c.bf16 %v383, %v382
    %v389 = vpack.c.bf16 %v385, %v384
    %v390 = vadd.bf16 %v212, %v386
    %v391 = vadd.bf16 %v213, %v387
    %v392 = vadd.bf16 %v214, %v388
    %v393 = vadd.bf16 %v215, %v389
    %s394 = scalar_lea.vmem %s3, 32
    %v395 = vld [vmem:[%s394] sm:$0xf]
    %v396 = vld [vmem:[%s394 + $0x4] sm:$0xf]
    %v397 = vld [vmem:[%s394 + $0x8] sm:$0xf]
    %v398 = vld [vmem:[%s394 + $0xc] sm:$0xf]
    %v399 = vld [vmem:[%s394 + $0x10] sm:$0xf]
    %v400 = vld [vmem:[%s394 + $0x14] sm:$0xf]
    %v401 = vld [vmem:[%s394 + $0x18] sm:$0xf]
    %v402 = vld [vmem:[%s394 + $0x1c] sm:$0xf]
    %s403 = scalar_lea.vmem %s4, 64
    %v404 = vld [vmem:[%s403] sm:$0xff]
    %v405 = vld [vmem:[%s403 + $0x8] sm:$0xff]
    %v406 = vld [vmem:[%s403 + $0x10] sm:$0xff]
    %v407 = vld [vmem:[%s403 + $0x18] sm:$0xff]
    %v408 = vld [vmem:[%s403 + $0x20] sm:$0xff]
    %v409 = vld [vmem:[%s403 + $0x28] sm:$0xff]
    %v410 = vld [vmem:[%s403 + $0x30] sm:$0xff]
    %v411 = vld [vmem:[%s403 + $0x38] sm:$0xff]
    %413 = vset.pattern.permute.xlu0 0
    %414 = vperm.xlu0 %413, %v404
    %v415 = vpop.permute.xlu0 %414
    %418 = vset.pattern.permute.xlu0 0
    %419 = vperm.xlu0 %418, %v405
    %v420 = vpop.permute.xlu0 %419
    %423 = vset.pattern.permute.xlu0 0
    %424 = vperm.xlu0 %423, %v406
    %v425 = vpop.permute.xlu0 %424
    %428 = vset.pattern.permute.xlu0 0
    %429 = vperm.xlu0 %428, %v407
    %v430 = vpop.permute.xlu0 %429
    %433 = vset.pattern.permute.xlu0 0
    %434 = vperm.xlu0 %433, %v408
    %v435 = vpop.permute.xlu0 %434
    %438 = vset.pattern.permute.xlu0 0
    %439 = vperm.xlu0 %438, %v409
    %v440 = vpop.permute.xlu0 %439
    %443 = vset.pattern.permute.xlu0 0
    %444 = vperm.xlu0 %443, %v410
    %v445 = vpop.permute.xlu0 %444
    %448 = vset.pattern.permute.xlu0 0
    %449 = vperm.xlu0 %448, %v411
    %v450 = vpop.permute.xlu0 %449
    %v460 = vunpack.c.l.b16 %v395
    %v461 = vunpack.c.l.b16 %v396
    %v462 = vunpack.c.l.b16 %v397
    %v463 = vunpack.c.l.b16 %v398
    %v464 = vunpack.c.l.b16 %v399
    %v465 = vunpack.c.l.b16 %v400
    %v466 = vunpack.c.l.b16 %v401
    %v467 = vunpack.c.l.b16 %v402
    %v468 = vpack.c.b16 %v461, %v460
    %v469 = vpack.c.b16 %v463, %v462
    %v470 = vpack.c.b16 %v465, %v464
    %v471 = vpack.c.b16 %v467, %v466
    %v473 = vsel %vm292, %v468, 0
    %v476 = vsel %vm292, %v469, 0
    %v479 = vsel %vm292, %v470, 0
    %v482 = vsel %vm292, %v471, 0
    %484 = vmatprep.subr.bf16.mxu0 0
    %485 = vmatpush1.bf16.msra.mxu0 %v390
    %486 = vmatprep.subr.bf16.mxu0 0
    %487 = vmatpush1.bf16.msra.mxu0 %v391
    %488 = vmatprep.subr.bf16.mxu0 0
    %489 = vmatpush1.bf16.msra.mxu0 %v392
    %490 = vmatprep.subr.bf16.mxu0 0
    %491 = vmatpush1.bf16.msra.mxu0 %v393
    %492 = vmatprep.subr.bf16.mxu0 0
    %493 = vmatpush1.bf16.msra.mxu0 0
    %494 = vmatprep.subr.bf16.mxu0 0
    %495 = vmatpush1.bf16.msra.mxu0 0
    %496 = vmatprep.subr.bf16.mxu0 0
    %497 = vmatpush1.bf16.msra.mxu0 0
    %498 = vmatprep.subr.bf16.mxu0 0
    %499 = vmatpush1.bf16.msra.mxu0 0
    %500 = vmatprep.subr.bf16.mxu0 0
    %501 = vmatpush1.bf16.msra.mxu0 0
    %502 = vmatprep.subr.bf16.mxu0 0
    %503 = vmatpush1.bf16.msra.mxu0 0
    %504 = vmatprep.subr.bf16.mxu0 0
    %505 = vmatpush1.bf16.msra.mxu0 0
    %506 = vmatprep.subr.bf16.mxu0 0
    %507 = vmatpush1.bf16.msra.mxu0 0
    %508 = vmatprep.subr.bf16.mxu0 0
    %509 = vmatpush1.bf16.msra.mxu0 0
    %510 = vmatprep.subr.bf16.mxu0 0
    %511 = vmatpush1.bf16.msra.mxu0 0
    %512 = vmatprep.subr.bf16.mxu0 0
    %513 = vmatpush1.bf16.msra.mxu0 0
    %514 = vmatprep.subr.bf16.mxu0 0
    %515 = vmatpush1.bf16.msra.mxu0 0
    %516 = vmatprep.mubr.bf16.mxu0 0
    %517 = vmatmul.mubr.bf16.gmra.mrb[0].mxu0 %v473
    %v518 = vpop.f32.mrb[0].mxu0
    %v519 = vadd.f32 %v415, %v518
    %v520 = vpop.f32.mrb[0].mxu0
    %v521 = vpop.f32.mrb[0].mxu0
    %v522 = vadd.f32 %v420, %v521
    %v523 = vpop.f32.mrb[0].mxu0
    %524 = vmatprep.mubr.bf16.mxu0 0
    %525 = vmatmul.mubr.bf16.gmra.mrb[0].mxu0 %v476
    %v526 = vpop.f32.mrb[0].mxu0
    %v527 = vadd.f32 %v425, %v526
    %v528 = vpop.f32.mrb[0].mxu0
    %v529 = vpop.f32.mrb[0].mxu0
    %v530 = vadd.f32 %v430, %v529
    %v531 = vpop.f32.mrb[0].mxu0
    %532 = vmatprep.mubr.bf16.mxu0 0
    %533 = vmatmul.mubr.bf16.gmra.mrb[0].mxu0 %v479
    %v534 = vpop.f32.mrb[0].mxu0
    %v535 = vadd.f32 %v435, %v534
    %v536 = vpop.f32.mrb[0].mxu0
    %v537 = vpop.f32.mrb[0].mxu0
    %v538 = vadd.f32 %v440, %v537
    %v539 = vpop.f32.mrb[0].mxu0
    %540 = vmatprep.mubr.bf16.mxu0 0
    %541 = vmatmul.mubr.bf16.gmra.mrb[0].mxu0 %v482
    %v542 = vpop.f32.mrb[0].mxu0
    %v543 = vadd.f32 %v445, %v542
    %v544 = vpop.f32.mrb[0].mxu0
    %v545 = vpop.f32.mrb[0].mxu0
    %v546 = vadd.f32 %v450, %v545
    %v547 = vpop.f32.mrb[0].mxu0
    %548 = vdwg.mxu0
    %v549 = vmul.f32 %v519, 0.01
    %v550 = vmul.f32 %v522, 0.01
    %v551 = vmul.f32 %v527, 0.01
    %v552 = vmul.f32 %v530, 0.01
    %v553 = vmul.f32 %v535, 0.01
    %v554 = vmul.f32 %v538, 0.01
    %v555 = vmul.f32 %v543, 0.01
    %v556 = vmul.f32 %v546, 0.01
    %v557 = vmax.f32 %v519, %v549
    %v558 = vmax.f32 %v522, %v550
    %v559 = vmax.f32 %v527, %v551
    %v560 = vmax.f32 %v530, %v552
    %v561 = vmax.f32 %v535, %v553
    %v562 = vmax.f32 %v538, %v554
    %v563 = vmax.f32 %v543, %v555
    %v564 = vmax.f32 %v546, %v556
    %v565 = vpack.c.bf16 %v558, %v557
    %v566 = vpack.c.bf16 %v560, %v559
    %v567 = vpack.c.bf16 %v562, %v561
    %v568 = vpack.c.bf16 %v564, %v563
    %v569 = vadd.bf16 %v390, %v565
    %v570 = vadd.bf16 %v391, %v566
    %v571 = vadd.bf16 %v392, %v567
    %v572 = vadd.bf16 %v393, %v568
    %s573 = scalar_lea.vmem %s3, 64
    %v574 = vld [vmem:[%s573] sm:$0xf]
    %v575 = vld [vmem:[%s573 + $0x4] sm:$0xf]
    %v576 = vld [vmem:[%s573 + $0x8] sm:$0xf]
    %v577 = vld [vmem:[%s573 + $0xc] sm:$0xf]
    %v578 = vld [vmem:[%s573 + $0x10] sm:$0xf]
    %v579 = vld [vmem:[%s573 + $0x14] sm:$0xf]
    %v580 = vld [vmem:[%s573 + $0x18] sm:$0xf]
    %v581 = vld [vmem:[%s573 + $0x1c] sm:$0xf]
    %s582 = scalar_lea.vmem %s4, 128
    %v583 = vld [vmem:[%s582] sm:$0xff]
    %v584 = vld [vmem:[%s582 + $0x8] sm:$0xff]
    %v585 = vld [vmem:[%s582 + $0x10] sm:$0xff]
    %v586 = vld [vmem:[%s582 + $0x18] sm:$0xff]
    %v587 = vld [vmem:[%s582 + $0x20] sm:$0xff]
    %v588 = vld [vmem:[%s582 + $0x28] sm:$0xff]
    %v589 = vld [vmem:[%s582 + $0x30] sm:$0xff]
    %v590 = vld [vmem:[%s582 + $0x38] sm:$0xff]
    %592 = vset.pattern.permute.xlu0 0
    %593 = vperm.xlu0 %592, %v583
    %v594 = vpop.permute.xlu0 %593
    %597 = vset.pattern.permute.xlu0 0
    %598 = vperm.xlu0 %597, %v584
    %v599 = vpop.permute.xlu0 %598
    %602 = vset.pattern.permute.xlu0 0
    %603 = vperm.xlu0 %602, %v585
    %v604 = vpop.permute.xlu0 %603
    %607 = vset.pattern.permute.xlu0 0
    %608 = vperm.xlu0 %607, %v586
    %v609 = vpop.permute.xlu0 %608
    %612 = vset.pattern.permute.xlu0 0
    %613 = vperm.xlu0 %612, %v587
    %v614 = vpop.permute.xlu0 %613
    %617 = vset.pattern.permute.xlu0 0
    %618 = vperm.xlu0 %617, %v588
    %v619 = vpop.permute.xlu0 %618
    %622 = vset.pattern.permute.xlu0 0
    %623 = vperm.xlu0 %622, %v589
    %v624 = vpop.permute.xlu0 %623
    %627 = vset.pattern.permute.xlu0 0
    %628 = vperm.xlu0 %627, %v590
    %v629 = vpop.permute.xlu0 %628
    %v639 = vunpack.c.l.b16 %v574
    %v640 = vunpack.c.l.b16 %v575
    %v641 = vunpack.c.l.b16 %v576
    %v642 = vunpack.c.l.b16 %v577
    %v643 = vunpack.c.l.b16 %v578
    %v644 = vunpack.c.l.b16 %v579
    %v645 = vunpack.c.l.b16 %v580
    %v646 = vunpack.c.l.b16 %v581
    %v647 = vpack.c.b16 %v640, %v639
    %v648 = vpack.c.b16 %v642, %v641
    %v649 = vpack.c.b16 %v644, %v643
    %v650 = vpack.c.b16 %v646, %v645
    %v652 = vsel %vm292, %v647, 0
    %v655 = vsel %vm292, %v648, 0
    %v658 = vsel %vm292, %v649, 0
    %v661 = vsel %vm292, %v650, 0
    %663 = vmatprep.subr.bf16.mxu0 0
    %664 = vmatpush1.bf16.msra.mxu0 %v569
    %665 = vmatprep.subr.bf16.mxu0 0
    %666 = vmatpush1.bf16.msra.mxu0 %v570
    %667 = vmatprep.subr.bf16.mxu0 0
    %668 = vmatpush1.bf16.msra.mxu0 %v571
    %669 = vmatprep.subr.bf16.mxu0 0
    %670 = vmatpush1.bf16.msra.mxu0 %v572
    %671 = vmatprep.subr.bf16.mxu0 0
    %672 = vmatpush1.bf16.msra.mxu0 0
    %673 = vmatprep.subr.bf16.mxu0 0
    %674 = vmatpush1.bf16.msra.mxu0 0
    %675 = vmatprep.subr.bf16.mxu0 0
    %676 = vmatpush1.bf16.msra.mxu0 0
    %677 = vmatprep.subr.bf16.mxu0 0
    %678 = vmatpush1.bf16.msra.mxu0 0
    %679 = vmatprep.subr.bf16.mxu0 0
    %680 = vmatpush1.bf16.msra.mxu0 0
    %681 = vmatprep.subr.bf16.mxu0 0
    %682 = vmatpush1.bf16.msra.mxu0 0
    %683 = vmatprep.subr.bf16.mxu0 0
    %684 = vmatpush1.bf16.msra.mxu0 0
    %685 = vmatprep.subr.bf16.mxu0 0
    %686 = vmatpush1.bf16.msra.mxu0 0
    %687 = vmatprep.subr.bf16.mxu0 0
    %688 = vmatpush1.bf16.msra.mxu0 0
    %689 = vmatprep.subr.bf16.mxu0 0
    %690 = vmatpush1.bf16.msra.mxu0 0
    %691 = vmatprep.subr.bf16.mxu0 0
    %692 = vmatpush1.bf16.msra.mxu0 0
    %693 = vmatprep.subr.bf16.mxu0 0
    %694 = vmatpush1.bf16.msra.mxu0 0
    %695 = vmatprep.mubr.bf16.mxu0 0
    %696 = vmatmul.mubr.bf16.gmra.mrb[0].mxu0 %v652
    %v697 = vpop.f32.mrb[0].mxu0
    %v698 = vadd.f32 %v594, %v697
    %v699 = vpop.f32.mrb[0].mxu0
    %v700 = vpop.f32.mrb[0].mxu0
    %v701 = vadd.f32 %v599, %v700
    %v702 = vpop.f32.mrb[0].mxu0
    %703 = vmatprep.mubr.bf16.mxu0 0
    %704 = vmatmul.mubr.bf16.gmra.mrb[0].mxu0 %v655
    %v705 = vpop.f32.mrb[0].mxu0
    %v706 = vadd.f32 %v604, %v705
    %v707 = vpop.f32.mrb[0].mxu0
    %v708 = vpop.f32.mrb[0].mxu0
    %v709 = vadd.f32 %v609, %v708
    %v710 = vpop.f32.mrb[0].mxu0
    %711 = vmatprep.mubr.bf16.mxu0 0
    %712 = vmatmul.mubr.bf16.gmra.mrb[0].mxu0 %v658
    %v713 = vpop.f32.mrb[0].mxu0
    %v714 = vadd.f32 %v614, %v713
    %v715 = vpop.f32.mrb[0].mxu0
    %v716 = vpop.f32.mrb[0].mxu0
    %v717 = vadd.f32 %v619, %v716
    %v718 = vpop.f32.mrb[0].mxu0
    %719 = vmatprep.mubr.bf16.mxu0 0
    %720 = vmatmul.mubr.bf16.gmra.mrb[0].mxu0 %v661
    %v721 = vpop.f32.mrb[0].mxu0
    %v722 = vadd.f32 %v624, %v721
    %v723 = vpop.f32.mrb[0].mxu0
    %v724 = vpop.f32.mrb[0].mxu0
    %v725 = vadd.f32 %v629, %v724
    %v726 = vpop.f32.mrb[0].mxu0
    %727 = vdwg.mxu0
    %v728 = vmul.f32 %v698, 0.01
    %v729 = vmul.f32 %v701, 0.01
    %v730 = vmul.f32 %v706, 0.01
    %v731 = vmul.f32 %v709, 0.01
    %v732 = vmul.f32 %v714, 0.01
    %v733 = vmul.f32 %v717, 0.01
    %v734 = vmul.f32 %v722, 0.01
    %v735 = vmul.f32 %v725, 0.01
    %v736 = vmax.f32 %v698, %v728
    %v737 = vmax.f32 %v701, %v729
    %v738 = vmax.f32 %v706, %v730
    %v739 = vmax.f32 %v709, %v731
    %v740 = vmax.f32 %v714, %v732
    %v741 = vmax.f32 %v717, %v733
    %v742 = vmax.f32 %v722, %v734
    %v743 = vmax.f32 %v725, %v735
    %v744 = vpack.c.bf16 %v737, %v736
    %v745 = vpack.c.bf16 %v739, %v738
    %v746 = vpack.c.bf16 %v741, %v740
    %v747 = vpack.c.bf16 %v743, %v742
    %v748 = vadd.bf16 %v569, %v744
    %v749 = vadd.bf16 %v570, %v745
    %v750 = vadd.bf16 %v571, %v746
    %v751 = vadd.bf16 %v572, %v747
    %s752 = scalar_lea.vmem %s3, 96
    %v753 = vld [vmem:[%s752] sm:$0xf]
    %v754 = vld [vmem:[%s752 + $0x4] sm:$0xf]
    %v755 = vld [vmem:[%s752 + $0x8] sm:$0xf]
    %v756 = vld [vmem:[%s752 + $0xc] sm:$0xf]
    %v757 = vld [vmem:[%s752 + $0x10] sm:$0xf]
    %v758 = vld [vmem:[%s752 + $0x14] sm:$0xf]
    %v759 = vld [vmem:[%s752 + $0x18] sm:$0xf]
    %v760 = vld [vmem:[%s752 + $0x1c] sm:$0xf]
    %s761 = scalar_lea.vmem %s4, 192
    %v762 = vld [vmem:[%s761] sm:$0xff]
    %v763 = vld [vmem:[%s761 + $0x8] sm:$0xff]
    %v764 = vld [vmem:[%s761 + $0x10] sm:$0xff]
    %v765 = vld [vmem:[%s761 + $0x18] sm:$0xff]
    %v766 = vld [vmem:[%s761 + $0x20] sm:$0xff]
    %v767 = vld [vmem:[%s761 + $0x28] sm:$0xff]
    %v768 = vld [vmem:[%s761 + $0x30] sm:$0xff]
    %v769 = vld [vmem:[%s761 + $0x38] sm:$0xff]
    %771 = vset.pattern.permute.xlu0 0
    %772 = vperm.xlu0 %771, %v762
    %v773 = vpop.permute.xlu0 %772
    %776 = vset.pattern.permute.xlu0 0
    %777 = vperm.xlu0 %776, %v763
    %v778 = vpop.permute.xlu0 %777
    %781 = vset.pattern.permute.xlu0 0
    %782 = vperm.xlu0 %781, %v764
    %v783 = vpop.permute.xlu0 %782
    %786 = vset.pattern.permute.xlu0 0
    %787 = vperm.xlu0 %786, %v765
    %v788 = vpop.permute.xlu0 %787
    %791 = vset.pattern.permute.xlu0 0
    %792 = vperm.xlu0 %791, %v766
    %v793 = vpop.permute.xlu0 %792
    %796 = vset.pattern.permute.xlu0 0
    %797 = vperm.xlu0 %796, %v767
    %v798 = vpop.permute.xlu0 %797
    %801 = vset.pattern.permute.xlu0 0
    %802 = vperm.xlu0 %801, %v768
    %v803 = vpop.permute.xlu0 %802
    %806 = vset.pattern.permute.xlu0 0
    %807 = vperm.xlu0 %806, %v769
    %v808 = vpop.permute.xlu0 %807
    %v818 = vunpack.c.l.b16 %v753
    %v819 = vunpack.c.l.b16 %v754
    %v820 = vunpack.c.l.b16 %v755
    %v821 = vunpack.c.l.b16 %v756
    %v822 = vunpack.c.l.b16 %v757
    %v823 = vunpack.c.l.b16 %v758
    %v824 = vunpack.c.l.b16 %v759
    %v825 = vunpack.c.l.b16 %v760
    %v826 = vpack.c.b16 %v819, %v818
    %v827 = vpack.c.b16 %v821, %v820
    %v828 = vpack.c.b16 %v823, %v822
    %v829 = vpack.c.b16 %v825, %v824
    %v831 = vsel %vm292, %v826, 0
    %v834 = vsel %vm292, %v827, 0
    %v837 = vsel %vm292, %v828, 0
    %v840 = vsel %vm292, %v829, 0
    %842 = vmatprep.subr.bf16.mxu0 0
    %843 = vmatpush1.bf16.msra.mxu0 %v748
    %844 = vmatprep.subr.bf16.mxu0 0
    %845 = vmatpush1.bf16.msra.mxu0 %v749
    %846 = vmatprep.subr.bf16.mxu0 0
    %847 = vmatpush1.bf16.msra.mxu0 %v750
    %848 = vmatprep.subr.bf16.mxu0 0
    %849 = vmatpush1.bf16.msra.mxu0 %v751
    %850 = vmatprep.subr.bf16.mxu0 0
    %851 = vmatpush1.bf16.msra.mxu0 0
    %852 = vmatprep.subr.bf16.mxu0 0
    %853 = vmatpush1.bf16.msra.mxu0 0
    %854 = vmatprep.subr.bf16.mxu0 0
    %855 = vmatpush1.bf16.msra.mxu0 0
    %856 = vmatprep.subr.bf16.mxu0 0
    %857 = vmatpush1.bf16.msra.mxu0 0
    %858 = vmatprep.subr.bf16.mxu0 0
    %859 = vmatpush1.bf16.msra.mxu0 0
    %860 = vmatprep.subr.bf16.mxu0 0
    %861 = vmatpush1.bf16.msra.mxu0 0
    %862 = vmatprep.subr.bf16.mxu0 0
    %863 = vmatpush1.bf16.msra.mxu0 0
    %864 = vmatprep.subr.bf16.mxu0 0
    %865 = vmatpush1.bf16.msra.mxu0 0
    %866 = vmatprep.subr.bf16.mxu0 0
    %867 = vmatpush1.bf16.msra.mxu0 0
    %868 = vmatprep.subr.bf16.mxu0 0
    %869 = vmatpush1.bf16.msra.mxu0 0
    %870 = vmatprep.subr.bf16.mxu0 0
    %871 = vmatpush1.bf16.msra.mxu0 0
    %872 = vmatprep.subr.bf16.mxu0 0
    %873 = vmatpush1.bf16.msra.mxu0 0
    %874 = vmatprep.mubr.bf16.mxu0 0
    %875 = vmatmul.mubr.bf16.gmra.mrb[0].mxu0 %v831
    %v876 = vpop.f32.mrb[0].mxu0
    %v877 = vadd.f32 %v773, %v876
    %v878 = vpop.f32.mrb[0].mxu0
    %v879 = vpop.f32.mrb[0].mxu0
    %v880 = vadd.f32 %v778, %v879
    %v881 = vpop.f32.mrb[0].mxu0
    %882 = vmatprep.mubr.bf16.mxu0 0
    %883 = vmatmul.mubr.bf16.gmra.mrb[0].mxu0 %v834
    %v884 = vpop.f32.mrb[0].mxu0
    %v885 = vadd.f32 %v783, %v884
    %v886 = vpop.f32.mrb[0].mxu0
    %v887 = vpop.f32.mrb[0].mxu0
    %v888 = vadd.f32 %v788, %v887
    %v889 = vpop.f32.mrb[0].mxu0
    %890 = vmatprep.mubr.bf16.mxu0 0
    %891 = vmatmul.mubr.bf16.gmra.mrb[0].mxu0 %v837
    %v892 = vpop.f32.mrb[0].mxu0
    %v893 = vadd.f32 %v793, %v892
    %v894 = vpop.f32.mrb[0].mxu0
    %v895 = vpop.f32.mrb[0].mxu0
    %v896 = vadd.f32 %v798, %v895
    %v897 = vpop.f32.mrb[0].mxu0
    %898 = vmatprep.mubr.bf16.mxu0 0
    %899 = vmatmul.mubr.bf16.gmra.mrb[0].mxu0 %v840
    %v900 = vpop.f32.mrb[0].mxu0
    %v901 = vadd.f32 %v803, %v900
    %v902 = vpop.f32.mrb[0].mxu0
    %v903 = vpop.f32.mrb[0].mxu0
    %v904 = vadd.f32 %v808, %v903
    %v905 = vpop.f32.mrb[0].mxu0
    %906 = vdwg.mxu0
    %v907 = vmul.f32 %v877, 0.01
    %v908 = vmul.f32 %v880, 0.01
    %v909 = vmul.f32 %v885, 0.01
    %v910 = vmul.f32 %v888, 0.01
    %v911 = vmul.f32 %v893, 0.01
    %v912 = vmul.f32 %v896, 0.01
    %v913 = vmul.f32 %v901, 0.01
    %v914 = vmul.f32 %v904, 0.01
    %v915 = vmax.f32 %v877, %v907
    %v916 = vmax.f32 %v880, %v908
    %v917 = vmax.f32 %v885, %v909
    %v918 = vmax.f32 %v888, %v910
    %v919 = vmax.f32 %v893, %v911
    %v920 = vmax.f32 %v896, %v912
    %v921 = vmax.f32 %v901, %v913
    %v922 = vmax.f32 %v904, %v914
    %v923 = vpack.c.bf16 %v916, %v915
    %v924 = vpack.c.bf16 %v918, %v917
    %v925 = vpack.c.bf16 %v920, %v919
    %v926 = vpack.c.bf16 %v922, %v921
    %v927 = vadd.bf16 %v748, %v923
    %v928 = vadd.bf16 %v749, %v924
    %v929 = vadd.bf16 %v750, %v925
    %v930 = vadd.bf16 %v751, %v926
    %931 = vst [vmem:[#allocation2] sm:$0xff] %v927
    %932 = vst [vmem:[#allocation2 + $0x8] sm:$0xff] %v928
    %933 = vst [vmem:[#allocation2 + $0x10] sm:$0xff] %v929
    %934 = vst [vmem:[#allocation2 + $0x18] sm:$0xff] %v930
    %935 = vst [vmem:[#allocation2 + $0x20] sm:$0xff] %v116
    %v936 = vld [vmem:[%s5] sm:$0xf]
    %v937 = vld [vmem:[%s5 + $0x4] sm:$0xf]
    %v938 = vld [vmem:[%s5 + $0x8] sm:$0xf]
    %v939 = vld [vmem:[%s5 + $0xc] sm:$0xf]
    %v940 = vld [vmem:[%s5 + $0x10] sm:$0xf]
    %v941 = vld [vmem:[%s5 + $0x14] sm:$0xf]
    %v942 = vld [vmem:[%s5 + $0x18] sm:$0xf]
    %v943 = vld [vmem:[%s5 + $0x1c] sm:$0xf]
    %v944 = vld [vmem:[#allocation2] sm:$0xff]
    %v945 = vld [vmem:[#allocation2 + $0x8] sm:$0xff]
    %v946 = vld [vmem:[#allocation2 + $0x10] sm:$0xff]
    %v947 = vld [vmem:[#allocation2 + $0x18] sm:$0xff]
    %v948 = vld [vmem:[#allocation2 + $0x20] sm:$0xff]
    %v949 = vld [vmem:[%s6] sm:$0xff]
    %v950 = vld [vmem:[%s6 + $0x8] sm:$0xff]
    %v951 = vld [vmem:[%s6 + $0x10] sm:$0xff]
    %v952 = vld [vmem:[%s6 + $0x18] sm:$0xff]
    %v953 = vld [vmem:[%s6 + $0x20] sm:$0xff]
    %v954 = vld [vmem:[%s6 + $0x28] sm:$0xff]
    %v955 = vld [vmem:[%s6 + $0x30] sm:$0xff]
    %v956 = vld [vmem:[%s6 + $0x38] sm:$0xff]
    %958 = vset.pattern.permute.xlu0 0
    %959 = vperm.xlu0 %958, %v949
    %v960 = vpop.permute.xlu0 %959
    %963 = vset.pattern.permute.xlu0 0
    %964 = vperm.xlu0 %963, %v950
    %v965 = vpop.permute.xlu0 %964
    %968 = vset.pattern.permute.xlu0 0
    %969 = vperm.xlu0 %968, %v951
    %v970 = vpop.permute.xlu0 %969
    %973 = vset.pattern.permute.xlu0 0
    %974 = vperm.xlu0 %973, %v952
    %v975 = vpop.permute.xlu0 %974
    %978 = vset.pattern.permute.xlu0 0
    %979 = vperm.xlu0 %978, %v953
    %v980 = vpop.permute.xlu0 %979
    %983 = vset.pattern.permute.xlu0 0
    %984 = vperm.xlu0 %983, %v954
    %v985 = vpop.permute.xlu0 %984
    %988 = vset.pattern.permute.xlu0 0
    %989 = vperm.xlu0 %988, %v955
    %v990 = vpop.permute.xlu0 %989
    %993 = vset.pattern.permute.xlu0 0
    %994 = vperm.xlu0 %993, %v956
    %v995 = vpop.permute.xlu0 %994
    %v1005 = vunpack.c.l.b16 %v936
    %v1006 = vunpack.c.l.b16 %v937
    %v1007 = vunpack.c.l.b16 %v938
    %v1008 = vunpack.c.l.b16 %v939
    %v1009 = vunpack.c.l.b16 %v940
    %v1010 = vunpack.c.l.b16 %v941
    %v1011 = vunpack.c.l.b16 %v942
    %v1012 = vunpack.c.l.b16 %v943
    %v1013 = vpack.c.b16 %v1006, %v1005
    %v1014 = vpack.c.b16 %v1008, %v1007
    %v1015 = vpack.c.b16 %v1010, %v1009
    %v1016 = vpack.c.b16 %v1012, %v1011
    %vm1017 = vcmask 654336
    %v1019 = vsel %vm1017, %v1013, 0
    %v1022 = vsel %vm1017, %v1014, 0
    %v1025 = vsel %vm1017, %v1015, 0
    %v1028 = vsel %vm1017, %v1016, 0
    %1030 = vmatprep.subr.bf16.mxu0 0
    %1031 = vmatpush1.bf16.msra.mxu0 %v944
    %1032 = vmatprep.subr.bf16.mxu0 0
    %1033 = vmatpush1.bf16.msra.mxu0 %v945
    %1034 = vmatprep.subr.bf16.mxu0 0
    %1035 = vmatpush1.bf16.msra.mxu0 %v946
    %1036 = vmatprep.subr.bf16.mxu0 0
    %1037 = vmatpush1.bf16.msra.mxu0 %v947
    %1038 = vmatprep.subr.bf16.mxu0 0
    %1039 = vmatpush1.bf16.msra.mxu0 %v948
    %1040 = vmatprep.subr.bf16.mxu0 0
    %1041 = vmatpush1.bf16.msra.mxu0 0
    %1042 = vmatprep.subr.bf16.mxu0 0
    %1043 = vmatpush1.bf16.msra.mxu0 0
    %1044 = vmatprep.subr.bf16.mxu0 0
    %1045 = vmatpush1.bf16.msra.mxu0 0
    %1046 = vmatprep.subr.bf16.mxu0 0
    %1047 = vmatpush1.bf16.msra.mxu0 0
    %1048 = vmatprep.subr.bf16.mxu0 0
    %1049 = vmatpush1.bf16.msra.mxu0 0
    %1050 = vmatprep.subr.bf16.mxu0 0
    %1051 = vmatpush1.bf16.msra.mxu0 0
    %1052 = vmatprep.subr.bf16.mxu0 0
    %1053 = vmatpush1.bf16.msra.mxu0 0
    %1054 = vmatprep.subr.bf16.mxu0 0
    %1055 = vmatpush1.bf16.msra.mxu0 0
    %1056 = vmatprep.subr.bf16.mxu0 0
    %1057 = vmatpush1.bf16.msra.mxu0 0
    %1058 = vmatprep.subr.bf16.mxu0 0
    %1059 = vmatpush1.bf16.msra.mxu0 0
    %1060 = vmatprep.subr.bf16.mxu0 0
    %1061 = vmatpush1.bf16.msra.mxu0 0
    %1062 = vmatprep.mubr.bf16.mxu0 0
    %1063 = vmatmul.mubr.bf16.gmra.mrb[0].mxu0 %v1019
    %v1064 = vpop.f32.mrb[0].mxu0
    %v1065 = vadd.f32 %v960, %v1064
    %v1066 = vpop.f32.mrb[0].mxu0
    %v1067 = vpop.f32.mrb[0].mxu0
    %v1068 = vadd.f32 %v965, %v1067
    %v1069 = vpop.f32.mrb[0].mxu0
    %1070 = vmatprep.mubr.bf16.mxu0 0
    %1071 = vmatmul.mubr.bf16.gmra.mrb[0].mxu0 %v1022
    %v1072 = vpop.f32.mrb[0].mxu0
    %v1073 = vadd.f32 %v970, %v1072
    %v1074 = vpop.f32.mrb[0].mxu0
    %v1075 = vpop.f32.mrb[0].mxu0
    %v1076 = vadd.f32 %v975, %v1075
    %v1077 = vpop.f32.mrb[0].mxu0
    %1078 = vmatprep.mubr.bf16.mxu0 0
    %1079 = vmatmul.mubr.bf16.gmra.mrb[0].mxu0 %v1025
    %v1080 = vpop.f32.mrb[0].mxu0
    %v1081 = vadd.f32 %v980, %v1080
    %v1082 = vpop.f32.mrb[0].mxu0
    %v1083 = vpop.f32.mrb[0].mxu0
    %v1084 = vadd.f32 %v985, %v1083
    %v1085 = vpop.f32.mrb[0].mxu0
    %1086 = vmatprep.mubr.bf16.mxu0 0
    %1087 = vmatmul.mubr.bf16.gmra.mrb[0].mxu0 %v1028
    %v1088 = vpop.f32.mrb[0].mxu0
    %v1089 = vadd.f32 %v990, %v1088
    %v1090 = vpop.f32.mrb[0].mxu0
    %v1091 = vpop.f32.mrb[0].mxu0
    %v1092 = vadd.f32 %v995, %v1091
    %v1093 = vpop.f32.mrb[0].mxu0
    %1094 = vdwg.mxu0
    %v1095 = vmul.f32 %v1065, 0.01
    %v1096 = vmul.f32 %v1068, 0.01
    %v1097 = vmul.f32 %v1073, 0.01
    %v1098 = vmul.f32 %v1076, 0.01
    %v1099 = vmul.f32 %v1081, 0.01
    %v1100 = vmul.f32 %v1084, 0.01
    %v1101 = vmul.f32 %v1089, 0.01
    %v1102 = vmul.f32 %v1092, 0.01
    %v1103 = vmax.f32 %v1065, %v1095
    %v1104 = vmax.f32 %v1068, %v1096
    %v1105 = vmax.f32 %v1073, %v1097
    %v1106 = vmax.f32 %v1076, %v1098
    %v1107 = vmax.f32 %v1081, %v1099
    %v1108 = vmax.f32 %v1084, %v1100
    %v1109 = vmax.f32 %v1089, %v1101
    %v1110 = vmax.f32 %v1092, %v1102
    %v1111 = vld [vmem:[%s7] sm:$0x3]
    %v1112 = vpack.c.bf16 %v1104, %v1103
    %v1113 = vpack.c.bf16 %v1106, %v1105
    %v1114 = vpack.c.bf16 %v1108, %v1107
    %v1115 = vpack.c.bf16 %v1110, %v1109
    %v1116 = vld [vmem:[%s8] sm:$0x7]
    %1118 = vset.pattern.permute.xlu0 0
    %1119 = vperm.xlu0 %1118, %v1116
    %v1120 = vpop.permute.xlu0 %1119
    %v1123 = vsel %vm292, %v1111, 0
    %1125 = vmatprep.subr.bf16.mxu0 0
    %1126 = vmatpush1.bf16.msra.mxu0 %v1112
    %1127 = vmatprep.subr.bf16.mxu0 0
    %1128 = vmatpush1.bf16.msra.mxu0 %v1113
    %1129 = vmatprep.subr.bf16.mxu0 0
    %1130 = vmatpush1.bf16.msra.mxu0 %v1114
    %1131 = vmatprep.subr.bf16.mxu0 0
    %1132 = vmatpush1.bf16.msra.mxu0 %v1115
    %1133 = vmatprep.subr.bf16.mxu0 0
    %1134 = vmatpush1.bf16.msra.mxu0 0
    %1135 = vmatprep.subr.bf16.mxu0 0
    %1136 = vmatpush1.bf16.msra.mxu0 0
    %1137 = vmatprep.subr.bf16.mxu0 0
    %1138 = vmatpush1.bf16.msra.mxu0 0
    %1139 = vmatprep.subr.bf16.mxu0 0
    %1140 = vmatpush1.bf16.msra.mxu0 0
    %1141 = vmatprep.subr.bf16.mxu0 0
    %1142 = vmatpush1.bf16.msra.mxu0 0
    %1143 = vmatprep.subr.bf16.mxu0 0
    %1144 = vmatpush1.bf16.msra.mxu0 0
    %1145 = vmatprep.subr.bf16.mxu0 0
    %1146 = vmatpush1.bf16.msra.mxu0 0
    %1147 = vmatprep.subr.bf16.mxu0 0
    %1148 = vmatpush1.bf16.msra.mxu0 0
    %1149 = vmatprep.subr.bf16.mxu0 0
    %1150 = vmatpush1.bf16.msra.mxu0 0
    %1151 = vmatprep.subr.bf16.mxu0 0
    %1152 = vmatpush1.bf16.msra.mxu0 0
    %1153 = vmatprep.subr.bf16.mxu0 0
    %1154 = vmatpush1.bf16.msra.mxu0 0
    %1155 = vmatprep.subr.bf16.mxu0 0
    %1156 = vmatpush1.bf16.msra.mxu0 0
    %1157 = vmatprep.mubr.bf16.mxu0 0
    %1158 = vmatmul.mubr.bf16.gmra.mrb[0].mxu0 %v1123
    %v1159 = vpop.f32.mrb[0].mxu0
    %v1160 = vadd.f32 %v1120, %v1159
    %v1161 = vpop.f32.mrb[0].mxu0
    %v1162 = vpop.f32.mrb[0].mxu0
    %v1163 = vpop.f32.mrb[0].mxu0
    %1164 = vdwg.mxu0
    %1165 = vst [vmem:[#allocation3] sm:$0x7] %v1160
    // Predicated region
    $region38: #{tpu_custom_call.1} parent=1 // pred_check
      _
    $region39: #{tpu_custom_call.1} parent=1 // pred_check_branch
      %1167 = sbr.rel (0) target = $region41
    $region40: #{tpu_custom_call.1} parent=1 // pred_region
      %s1169 = ssub.s32 64, 64
      %1170 = vsyncadd [#allocation4], %s1169
      %s1172 = sshll.u32 [#allocation3], 4
      %s1173 = int_to_ptr.vmem [resolvable:$true] %s1172
      %1175 = dma.vmem_to_hbm [thread:$0]  %s1173, 64, %s9, [#allocation4]
    $region41: #{tpu_custom_call.1} parent=1 // pred_fallthru
      _
    // Predicated region
    $region42: #{tpu_custom_call.1} parent=1 // pred_check
      _
    $region43: #{tpu_custom_call.1} parent=1 // pred_check_branch
      %1177 = sbr.rel (0) target = $region45
    $region44: #{tpu_custom_call.1} parent=1 // pred_region
      %1178 = dma.done [#allocation4], 64
    $region45: #{tpu_custom_call.1} parent=1 // pred_fallthru
      _
    %1179 = vsyncpa [#allocation4], 1

</llo_original>
